<compile_context>
chip_gen: v5e
topology: v5e:2x2
jax: 0.10.0
libtpu: 0.0.40
codegen_flags: <defaults>
</compile_context>

<pallas_src>
import jax
import jax.numpy as jnp
import numpy as np
from jax import lax
from jax.experimental import pallas as pl
from jax.experimental.pallas import tpu as pltpu

RES = 200  # self.res in the module


def _spectral_wave_kernel(v_ref, m_ref, o_ref):
    """One fused MXU matmul per (t, row-block):  out = [v_re | v_im] @ M[t]."""
    vv = v_ref[0]                                                   # (rows_blk, 2X)
    mm = m_ref[0]                                                   # (2X, res_pad)
    out = jnp.dot(vv, mm, preferred_element_type=jnp.float32)       # (rows_blk, res_pad)
    o_ref[...] = out.reshape(o_ref.shape).astype(o_ref.dtype)


def _theta_tables(modes_out, res, res_pad):
    """cos/sin of theta[o,r] = 2*pi*freq[o]*x_res[r]/L, zero-padded to res_pad lanes."""
    x_res = jnp.linspace(0.0, 1.0, res, dtype=jnp.float32)
    freqs = jnp.fft.fftfreq(res, d=(x_res[1] - x_res[0]))[:modes_out].astype(jnp.float32)
    theta = 2.0 * jnp.pi * freqs[:, None] * x_res[None, :]          # (O, res)
    pad = res_pad - res
    cos_th = jnp.pad(jnp.cos(theta), ((0, 0), (0, pad))).astype(jnp.float32)
    sin_th = jnp.pad(jnp.sin(theta), ((0, 0), (0, pad))).astype(jnp.float32)
    return cos_th, sin_th


def _pick_rows_block(rows, out_row_bytes, target_bytes):
    """Largest legal row block: full `rows`, or a multiple-of-8 divisor of `rows`."""
    if rows * out_row_bytes <= target_bytes:
        return rows
    best = None
    r = 8
    while r < rows and r * out_row_bytes <= target_bytes:
        if rows % r == 0:
            best = r
        r += 8
    if best is not None:
        return best
    for r in range(8, rows, 8):                # smallest legal block as a fallback
        if rows % r == 0:
            return r
    return rows


def spectral_conv1d_wave(v, w_re, w_im, *, modes_in, modes_out, res=RES, rows_block=None):
    """v: [B, T, H, 2, X]; w_re/w_im: [T, modes_out, modes_in]. Returns [B, T, res, H]."""
    B, T, H = v.shape[0], v.shape[1], v.shape[2]
    X = modes_in
    if v.shape[-1] != X:                       # module uses x_ft[..., :modes_in]
        v = v[..., :X]

    res_pad = ((res + 127) // 128) * 128       # lane-dense output tiles (unmasked stores)

    # ---- parameter-only precompute (independent of the batch): fold the complex
    # ---- weights and the cos/sin(theta) projection into one matrix per time step.
    cos_th, sin_th = _theta_tables(modes_out, res, res_pad)          # (O, res_pad) each
    hp = lax.Precision.HIGHEST
    m_re = (jnp.einsum('tox,or->txr', w_re, cos_th, precision=hp)
            - jnp.einsum('tox,or->txr', w_im, sin_th, precision=hp))        # acts on v_re
    m_im = -(jnp.einsum('tox,or->txr', w_im, cos_th, precision=hp)
             + jnp.einsum('tox,or->txr', w_re, sin_th, precision=hp))       # acts on v_im
    m_fused = jnp.concatenate([m_re, m_im], axis=1).astype(jnp.float32)     # (T, 2X, res_pad)

    # ---- layout plumbing: rows = (b, h) flattened; contraction axis = [re|im]*X on lanes.
    v2 = jnp.transpose(v.reshape(B, T, H, 2 * X), (1, 0, 2, 3))
    v2 = v2.reshape(T, B * H, 2 * X).astype(jnp.float32)

    rows = B * H
    if rows_block is None:
        rows_block = _pick_rows_block(rows, (res_pad + 2 * X) * 4, 2 << 20)

    out = pl.pallas_call(
        _spectral_wave_kernel,
        out_shape=jax.ShapeDtypeStruct((T, rows, res_pad), jnp.float32),
        grid_spec=pltpu.PrefetchScalarGridSpec(
            num_scalar_prefetch=0,
            grid=(T, rows // rows_block),      # t slow -> M[t] stays resident over rows
            in_specs=[
                pl.BlockSpec((1, rows_block, 2 * X), lambda t, ri: (t, ri, 0)),
                pl.BlockSpec((1, 2 * X, res_pad), lambda t, ri: (t, 0, 0)),
            ],
            out_specs=pl.BlockSpec((1, rows_block, res_pad), lambda t, ri: (t, ri, 0)),
        ),
        compiler_params=pltpu.CompilerParams(
            dimension_semantics=("parallel", "parallel")),
    )(v2, m_fused)

    # Match PyTorch output layout [B, T, RES, H] (H is small, so it cannot be lane-dense
    # anyway -> do the minor-dim transpose once in XLA on the sliced result).
    out = out[..., :res].reshape(T, B, H, res)
    return jnp.transpose(out, (1, 0, 3, 2))


def _reference(v, w_re, w_im, *, modes_in, modes_out, res=RES):
    """Pure-JAX transcription of the PyTorch forward (abs/angle/cos path)."""
    r = v[:, :, :, 0, :modes_in]
    i = v[:, :, :, 1, :modes_in]
    z = (r + 1j * i)[:, :, :, None, :] * (w_re + 1j * w_im)[None, :, None, :, :]
    amp = jax.nn.relu(jnp.abs(z))
    ph = jnp.angle(z)
    x_res = jnp.linspace(0.0, 1.0, res, dtype=jnp.float32)
    freqs = jnp.fft.fftfreq(res, d=(x_res[1] - x_res[0]))[:modes_out].astype(jnp.float32)
    theta = 2.0 * jnp.pi * (freqs[:, None] * x_res[None, :])           # (O, RES)
    ivec = amp[..., None] * jnp.cos(theta[None, None, None, :, None, :] + ph[..., None])
    # permute [b,t,h,o,x,res] -> [b,t,res,h,o,x], sum over x then o
    return jnp.transpose(ivec, (0, 1, 5, 2, 3, 4)).sum(-1).sum(-1)


if __name__ == "__main__":
    # small shapes consistent with the module's forward
    B, T, H = 2, 3, 8           # batch, time_seq, hidden_dimension (d_model)
    modes_in, modes_out = 4, 4

    key = jax.random.PRNGKey(0)
    k_v, k_wr, k_wi = jax.random.split(key, 3)

    # input v: [B, time_seq, d_model, 2 (re/im), modes_in]
    v = jax.random.normal(k_v, (B, T, H, 2, modes_in), dtype=jnp.float32)

    # weights1: scale * rand(time_seq, 1, 1, modes_out, modes_in, cfloat)
    # -> deterministic uniform [0,1) real & imag parts, squeezed to [T, O, X]
    scale = 1.0 / (modes_in * modes_out)
    w_re = scale * jax.random.uniform(k_wr, (T, modes_out, modes_in), dtype=jnp.float32)
    w_im = scale * jax.random.uniform(k_wi, (T, modes_out, modes_in), dtype=jnp.float32)

    out = spectral_conv1d_wave(v, w_re, w_im, modes_in=modes_in, modes_out=modes_out)
    out = jax.block_until_ready(out)
    assert out.shape == (B, T, RES, H), out.shape

    ref = _reference(v, w_re, w_im, modes_in=modes_in, modes_out=modes_out)
    np.testing.assert_allclose(np.asarray(out), np.asarray(ref), rtol=2e-3, atol=2e-3)

    print("KERNEL_OK")
</pallas_src>

<mosaic_0001>
module attributes {stable_mosaic.version = 11 : i64} {
  func.func @_spectral_wave_kernel(%arg0: i32, %arg1: i32, %arg2: memref<1x16x8xf32, #tpu.memory_space<vmem>>, %arg3: memref<1x8x256xf32, #tpu.memory_space<vmem>>, %arg4: memref<1x16x256xf32, #tpu.memory_space<vmem>>) attributes {dimension_semantics = [#tpu.dimension_semantics<parallel>, #tpu.dimension_semantics<parallel>], iteration_bounds = array<i64: 3, 1>, scalar_prefetch = 0 : i64, scratch_operands = 0 : i64, tpu.core_type = #tpu.core_type<tc>, window_params = [{transform_indices = @transform_0, window_bounds = array<i64: 1, 16, 8>}, {transform_indices = @transform_1, window_bounds = array<i64: 1, 8, 256>}, {transform_indices = @transform_2, window_bounds = array<i64: 1, 16, 256>}]} {
    %c0 = arith.constant 0 : index
    %c0_0 = arith.constant 0 : index
    %c0_1 = arith.constant 0 : index
    %0 = vector.load %arg2[%c0, %c0_0, %c0_1] : memref<1x16x8xf32, #tpu.memory_space<vmem>>, vector<1x16x8xf32>
    %1 = vector.shape_cast %0 : vector<1x16x8xf32> to vector<16x8xf32>
    %c0_2 = arith.constant 0 : index
    %c0_3 = arith.constant 0 : index
    %c0_4 = arith.constant 0 : index
    %2 = vector.load %arg3[%c0_2, %c0_3, %c0_4] : memref<1x8x256xf32, #tpu.memory_space<vmem>>, vector<1x8x256xf32>
    %3 = vector.shape_cast %2 : vector<1x8x256xf32> to vector<8x256xf32>
    %cst = arith.constant dense<0.000000e+00> : vector<16x256xf32>
    %4 = tpu.matmul %1, %3, %cst {dimension_numbers = #tpu.dot_dimension_numbers<[1], [0], [0], [1], [0, 0, 1, 1], [], []>} : vector<16x8xf32>, vector<8x256xf32>, vector<16x256xf32> -> vector<16x256xf32>
    %5 = vector.shape_cast %4 : vector<16x256xf32> to vector<1x16x256xf32>
    %c0_5 = arith.constant 0 : index
    %c0_6 = arith.constant 0 : index
    %c0_7 = arith.constant 0 : index
    %6 = vector.load %arg4[%c0_5, %c0_6, %c0_7] : memref<1x16x256xf32, #tpu.memory_space<vmem>>, vector<1x16x256xf32>
    tpu.vector_store %arg4[%c0_5, %c0_6, %c0_7], %5 {strides = array<i32>} : memref<1x16x256xf32, #tpu.memory_space<vmem>>, vector<1x16x256xf32>,
    return
  }
  func.func @transform_0(%arg0: i32, %arg1: i32) -> (i32, i32, i32) {
    %c0_i32 = arith.constant 0 : i32
    %c0_i32_0 = arith.constant 0 : i32
    return %arg0, %arg1, %c0_i32 : i32, i32, i32
  }
  func.func @transform_1(%arg0: i32, %arg1: i32) -> (i32, i32, i32) {
    %c0_i32 = arith.constant 0 : i32
    %c0_i32_0 = arith.constant 0 : i32
    %c0_i32_1 = arith.constant 0 : i32
    return %arg0, %c0_i32, %c0_i32_0 : i32, i32, i32
  }
  func.func @transform_2(%arg0: i32, %arg1: i32) -> (i32, i32, i32) {
    %c0_i32 = arith.constant 0 : i32
    %c0_i32_0 = arith.constant 0 : i32
    return %arg0, %arg1, %c0_i32 : i32, i32, i32
  }
}

</mosaic_0001>

<llo_original>
// kernel: tpu_custom_call.1
$region0: #{tpu_custom_call.1}
  #allocation0 [shape = 'u32[]', space=smem, size = 0x4, offset = 0x4, fixed_abs, tag = 'smem constant byte address 0x4 - core index']
  #allocation1 [shape = 'u32[72,128]{1,0:T(1,128)}', space=vmem, size = 0x9000, scoped, tag = 'internal scratch']
  %s0 = inlined_call_operand.vmem [shape: f32[3,16,8], index: 0, kind: input, shape index: {}]
  %s1 = inlined_call_operand.vmem [shape: f32[3,8,256], index: 1, kind: input, shape index: {}]
  %s2 = inlined_call_operand.hbm [shape: f32[3,16,256], index: 2, kind: output, shape index: {}]
  %s3 = sld [smem:[#allocation0]]
  $region41: #{tpu_custom_call.1} parent=0
    _
  %s5 = ssub.s32 1, %s3
  %s6 = scalar_select 0, %s5, %s3
  $region1: #{tpu_custom_call.1} parent=0
    #allocation2 [shape = 'u8[32768]{0}', space=vmem, size = 0x8000, scoped, tag = 'output window, operand 0']
    #allocation3 [shape = 's32[2]{0}', space=sflag, size = 0x8, scoped, tag = 'scoped memory for tpu_custom_call.1']
    %7 = vsyncpa [#allocation3], 0
    %s8 = scalar_lea.sflag [#allocation3], 1
    %9 = vsyncpa %s8, 0
    loop: start=0, step=1, limit=5
    $region2: #{tpu_custom_call.1} parent=1 // loop_pre_header
      _
    $region3: #{tpu_custom_call.1} parent=1 // loop_header
      %s11 = sphi 0, %s15
      %p12 = scmp.ge.s32.totalorder %s11, 5
      %s18 = sphi 0, %s30
      %s19 = sphi 0, %s26
      %s20 = sphi 0, %s18
      %s21 = sphi 0, %s19
      %s22 = sphi 0, %s20
      %s23 = sphi 0, %s21
      %s35 = sphi 0, %s37
      %s38 = sphi 0, %s35
      %s39 = sphi 0, %s38
      %s55 = sphi 0, %s39
      %s61 = sphi 0, %s63
      %s64 = sphi 0, %s61
      %s65 = sphi 0, %s64
      %s81 = sphi 0, %s65
      %s89 = sphi 0, %s91
      %s92 = sphi 0, %s89
      %s93 = sphi 0, %s92
      %s109 = sphi 0, %s93
    $region4: #{tpu_custom_call.1} parent=1 // loop_header_branch
      %14 = sbr.rel (%p12) target = $region8
    $region5: #{tpu_custom_call.1} parent=1 // loop_body
      %s16 = ssub.s32 %s11, 1
      %s17 = ssub.s32 %s11, 2
      %s24 = sadd.s32 1, %s19
      %p25 = scmp.ge.s32.totalorder %s24, 1
      %s26 = scalar_select %p25, 0, %s24
      %s27 = sadd.s32 1, %s18
      %s28 = scalar_select %p25, %s27, %s18
      %p29 = scmp.ge.s32.totalorder %s28, 3
      %s30 = scalar_select %p29, 0, %s28
      %s31 = ssub.s32 %s18, %s30
      %s32 = ssub.s32 %s19, %s26
      %s33 = sor.u32 %s31, %s32
      %p34 = scmp.eq.s32.totalorder %s33, 0
      %s36 = sadd.s32 %s35, 1
      %s37 = scalar_select %p34, %s35, %s36
      %p40 = pneg %p34
      %p41 = scmp.eq.s32.totalorder %s11, 2
      %p42 = por %p40, %p41
      %p43 = scmp.ne.s32.totalorder %s35, %s38
      %p44 = scmp.eq.s32.totalorder %s11, 0
      %p45 = por %p43, %p44
      %p46 = scmp.ne.s32.totalorder %s35, %s38
      %p47 = scmp.eq.s32.totalorder %s16, 2
      %p48 = por %p46, %p47
      %p49 = scmp.ne.s32.totalorder %s38, %s39
      %p50 = scmp.eq.s32.totalorder %s16, 0
      %p51 = por %p49, %p50
      %p52 = scmp.ne.s32.totalorder %s38, %s39
      %p53 = scmp.eq.s32.totalorder %s17, 2
      %p54 = por %p52, %p53
      %p56 = scmp.ne.s32.totalorder %s39, %s55
      %p57 = scmp.eq.s32.totalorder %s17, 0
      %p58 = por %p56, %p57
      %s59 = ssub.s32 %s18, %s30
      %p60 = scmp.eq.s32.totalorder %s59, 0
      %s62 = sadd.s32 %s61, 1
      %s63 = scalar_select %p60, %s61, %s62
      %p66 = pneg %p60
      %p67 = scmp.eq.s32.totalorder %s11, 2
      %p68 = por %p66, %p67
      %p69 = scmp.ne.s32.totalorder %s61, %s64
      %p70 = scmp.eq.s32.totalorder %s11, 0
      %p71 = por %p69, %p70
      %p72 = scmp.ne.s32.totalorder %s61, %s64
      %p73 = scmp.eq.s32.totalorder %s16, 2
      %p74 = por %p72, %p73
      %p75 = scmp.ne.s32.totalorder %s64, %s65
      %p76 = scmp.eq.s32.totalorder %s16, 0
      %p77 = por %p75, %p76
      %p78 = scmp.ne.s32.totalorder %s64, %s65
      %p79 = scmp.eq.s32.totalorder %s17, 2
      %p80 = por %p78, %p79
      %p82 = scmp.ne.s32.totalorder %s65, %s81
      %p83 = scmp.eq.s32.totalorder %s17, 0
      %p84 = por %p82, %p83
      %s85 = ssub.s32 %s18, %s30
      %s86 = ssub.s32 %s19, %s26
      %s87 = sor.u32 %s85, %s86
      %p88 = scmp.eq.s32.totalorder %s87, 0
      %s90 = sadd.s32 %s89, 1
      %s91 = scalar_select %p88, %s89, %s90
      %p94 = pneg %p88
      %p95 = scmp.eq.s32.totalorder %s11, 2
      %p96 = por %p94, %p95
      %p97 = scmp.ne.s32.totalorder %s89, %s92
      %p98 = scmp.eq.s32.totalorder %s11, 0
      %p99 = por %p97, %p98
      %p100 = scmp.ne.s32.totalorder %s89, %s92
      %p101 = scmp.eq.s32.totalorder %s16, 2
      %p102 = por %p100, %p101
      %p103 = scmp.ne.s32.totalorder %s92, %s93
      %p104 = scmp.eq.s32.totalorder %s16, 0
      %p105 = por %p103, %p104
      %p106 = scmp.ne.s32.totalorder %s92, %s93
      %p107 = scmp.eq.s32.totalorder %s17, 2
      %p108 = por %p106, %p107
      %p110 = scmp.ne.s32.totalorder %s93, %s109
      %p111 = scmp.eq.s32.totalorder %s17, 0
      %p112 = por %p110, %p111
      %p113 = scmp.le.s32.totalorder 1, %s11
      %p114 = scmp.lt.s32.totalorder %s11, 4
      %p115 = pnand %p113, %p114
      %p116 = pneg %p115
      // Predicated region
      $region9: #{tpu_custom_call.1} parent=5 // pred_check
        _
      $region10: #{tpu_custom_call.1} parent=5 // pred_check_branch
        %118 = sbr.rel (%p115) target = $region12
      $region11: #{tpu_custom_call.1} parent=5 // pred_region
        %s119 = ssub.s32 %s11, 1
      $region12: #{tpu_custom_call.1} parent=5 // pred_fallthru
        _
      %p120 = scmp.lt.s32.totalorder %s11, 3
      // Predicated region
      $region13: #{tpu_custom_call.1} parent=5 // pred_check
        %p121 = pneg %p120
      $region14: #{tpu_custom_call.1} parent=5 // pred_check_branch
        %123 = sbr.rel (%p121) target = $region16
      $region15: #{tpu_custom_call.1} parent=5 // pred_region
        // Predicated region
        $region17: #{tpu_custom_call.1} parent=15 // pred_check
          %p124 = pneg %p45
        $region18: #{tpu_custom_call.1} parent=15 // pred_check_branch
          %126 = sbr.rel (%p124) target = $region20
        $region19: #{tpu_custom_call.1} parent=15 // pred_region
          %s127 = smul.u32 2, %s19
          %p128 = scmp.lt.s32.totalorder %s18, 2
          %s129 = scalar_select %p128, %s18, 2
          %p130 = scmp.lt.s32.totalorder %s127, 1
          %s131 = scalar_select %p130, %s127, 1
          %s132 = smul.addr %s129, 2
          %s133 = sadd.s32 %s131, %s132
          %s134 = smul.addr %s133, 8
          %s135 = scalar_lea.vmem %s0, %s134
          %s136 = smul.u32 2, %s19
        $region20: #{tpu_custom_call.1} parent=15 // pred_fallthru
          _
        // Predicated region
        $region21: #{tpu_custom_call.1} parent=15 // pred_check
          %p137 = pneg %p71
        $region22: #{tpu_custom_call.1} parent=15 // pred_check_branch
          %139 = sbr.rel (%p137) target = $region24
        $region23: #{tpu_custom_call.1} parent=15 // pred_region
          %p140 = scmp.lt.s32.totalorder %s18, 2
          %s141 = scalar_select %p140, %s18, 2
          %s142 = smul.addr %s141, 2
          %s143 = smul.addr %s142, 8
          %s144 = scalar_lea.vmem %s1, %s143
        $region24: #{tpu_custom_call.1} parent=15 // pred_fallthru
          _
      $region16: #{tpu_custom_call.1} parent=5 // pred_fallthru
        _
      %p145 = scmp.le.s32.totalorder 1, %s11
      %p146 = scmp.lt.s32.totalorder %s11, 4
      %p147 = pnand %p145, %p146
      %p148 = pneg %p147
      // Predicated region
      $region25: #{tpu_custom_call.1} parent=5 // pred_check
        _
      $region26: #{tpu_custom_call.1} parent=5 // pred_check_branch
        %150 = sbr.rel (%p147) target = $region28
      $region27: #{tpu_custom_call.1} parent=5 // pred_region
        %s151 = ssub.s32 %s11, 1
        %s152 = smul.u32 2, %s21
        %p153 = scmp.lt.s32.totalorder %s20, 2
        %s154 = scalar_select %p153, %s20, 2
        %p155 = scmp.lt.s32.totalorder %s152, 1
        %s156 = scalar_select %p155, %s152, 1
        %s157 = smul.addr %s154, 2
        %s158 = sadd.s32 %s156, %s157
        %s159 = smul.addr %s158, 8
        %s160 = scalar_lea.vmem %s0, %s159
        %p161 = pneg %p51
        %p162 = pneg %p48
        %p163 = scmp.lt.s32.totalorder %s20, 2
        %s164 = scalar_select %p163, %s20, 2
        %s165 = smul.addr %s164, 2
        %s166 = smul.addr %s165, 8
        %s167 = scalar_lea.vmem %s1, %s166
        %p168 = pneg %p77
        %p169 = pneg %p74
        %p170 = pneg %p105
        %p171 = pneg %p102
        %s172 = sand.u32 %s92, 1
        %s173 = scalar_lea.sflag [#allocation3], %s172
        %s174 = sand.u32 %s92, 1
        %s175 = smul.addr %s174, 32
        %s176 = scalar_lea.vmem [#allocation2], %s175
        %s177 = smul.u32 2, %s21
        %p178 = scmp.lt.s32.totalorder %s20, 2
        %s179 = scalar_select %p178, %s20, 2
        %p180 = scmp.lt.s32.totalorder %s177, 1
        %s181 = scalar_select %p180, %s177, 1
        %s182 = smul.addr %s179, 2
        %s183 = sadd.s32 %s181, %s182
        %s184 = smul.addr %s183, 8
        %s185 = scalar_lea.vmem %s0, %s184
        %s186 = smul.u32 2, %s21
        %p187 = scmp.lt.s32.totalorder %s20, 2
        %s188 = scalar_select %p187, %s20, 2
        %s189 = smul.addr %s188, 2
        %s190 = smul.addr %s189, 8
        %s191 = scalar_lea.vmem %s1, %s190
        %s192 = smul.u32 2, %s21
        %v193 = vld [vmem:[%s185] sm:$0xff]
        %v194 = vld [vmem:[%s185 + $0x8] sm:$0xff]
        %v195 = vld [vmem:[%s191] sm:$0xff]
        %v196 = vld [vmem:[%s191 + $0x8] sm:$0xff]
        %vm197 = vcmask 64512
        %v199 = vsel %vm197, %v193, 0
        %v202 = vsel %vm197, %v194, 0
        %204 = vmatpush.msra.mxu0 0.0
        %205 = vmatpush.msra.mxu0 0.0
        %206 = vmatpush.msra.mxu0 0.0
        %207 = vmatpush.msra.mxu0 0.0
        %208 = vmatpush.msra.mxu0 0.0
        %209 = vmatpush.msra.mxu0 0.0
        %210 = vmatpush.msra.mxu0 0.0
        %211 = vmatpush.msra.mxu0 0.0
        %212 = vmatpush.msra.mxu0 0.0
        %213 = vmatpush.msra.mxu0 0.0
        %214 = vmatpush.msra.mxu0 0.0
        %215 = vmatpush.msra.mxu0 0.0
        %216 = vmatpush.msra.mxu0 0.0
        %217 = vmatpush.msra.mxu0 0.0
        %218 = vmatpush.msra.mxu0 0.0
        %219 = vmatpush.msra.mxu0 %v195
        %220 = vmatmul.f32.gmra.mxu0 %v199
        %v221 = vpop.f32.mrf.mxu0
        %v222 = vadd.f32 0.0, %v221
        %223 = vmatmul.f32.gmra.mxu0 %v202
        %v224 = vpop.f32.mrf.mxu0
        %v225 = vadd.f32 0.0, %v224
        %226 = vdwg.mxu0
        %227 = vmatpush.msra.mxu0 0.0
        %228 = vmatpush.msra.mxu0 0.0
        %229 = vmatpush.msra.mxu0 0.0
        %230 = vmatpush.msra.mxu0 0.0
        %231 = vmatpush.msra.mxu0 0.0
        %232 = vmatpush.msra.mxu0 0.0
        %233 = vmatpush.msra.mxu0 0.0
        %234 = vmatpush.msra.mxu0 0.0
        %235 = vmatpush.msra.mxu0 0.0
        %236 = vmatpush.msra.mxu0 0.0
        %237 = vmatpush.msra.mxu0 0.0
        %238 = vmatpush.msra.mxu0 0.0
        %239 = vmatpush.msra.mxu0 0.0
        %240 = vmatpush.msra.mxu0 0.0
        %241 = vmatpush.msra.mxu0 0.0
        %242 = vmatpush.msra.mxu0 %v196
        %243 = vmatmul.f32.gmra.mxu0 %v199
        %v244 = vpop.f32.mrf.mxu0
        %v245 = vadd.f32 0.0, %v244
        %246 = vmatmul.f32.gmra.mxu0 %v202
        %v247 = vpop.f32.mrf.mxu0
        %v248 = vadd.f32 0.0, %v247
        %249 = vdwg.mxu0
        %250 = vst [vmem:[%s176] sm:$0xff] %v222
        %251 = vst [vmem:[%s176 + $0x8] sm:$0xff] %v245
        %252 = vst [vmem:[%s176 + $0x10] sm:$0xff] %v225
        %253 = vst [vmem:[%s176 + $0x18] sm:$0xff] %v248
        %s254 = sand.u32 %s92, 1
        %s255 = scalar_lea.sflag [#allocation3], %s254
        %s256 = sand.u32 %s92, 1
        %s257 = smul.addr %s256, 32
        %s258 = scalar_lea.vmem [#allocation2], %s257
        // Predicated region
        $region29: #{tpu_custom_call.1} parent=27 // pred_check
          %p259 = pneg %p102
        $region30: #{tpu_custom_call.1} parent=27 // pred_check_branch
          %261 = sbr.rel (%p259) target = $region32
        $region31: #{tpu_custom_call.1} parent=27 // pred_region
          %s262 = smul.u32 2, %s21
          %264 = vsyncadd %s255, 0
          %s265 = smul.addr %s262, 2
          %s266 = smul.addr %s20, 4
          %s267 = sadd.s32 %s265, %s266
          %s268 = smul.addr %s267, 8
          %s269 = scalar_lea.hbm %s2, %s268
          %s270 = sshll.u32 %s258, 4
          %s271 = int_to_ptr.vmem [resolvable:$true] %s270
          %s272 = sshll.u32 %s269, 4
          %s273 = int_to_ptr.hbm [resolvable:$true] %s272
          %278 = dma.vmem_to_hbm [thread:$0]  %s271, 512, %s273, %s255, 256, 256, 16
        $region32: #{tpu_custom_call.1} parent=27 // pred_fallthru
          _
      $region28: #{tpu_custom_call.1} parent=5 // pred_fallthru
        _
      %p279 = scmp.le.s32.totalorder 2, %s11
      // Predicated region
      $region33: #{tpu_custom_call.1} parent=5 // pred_check
        %p280 = pneg %p279
      $region34: #{tpu_custom_call.1} parent=5 // pred_check_branch
        %282 = sbr.rel (%p280) target = $region36
      $region35: #{tpu_custom_call.1} parent=5 // pred_region
        %s283 = ssub.s32 %s11, 2
        // Predicated region
        $region37: #{tpu_custom_call.1} parent=35 // pred_check
          %p284 = pneg %p108
        $region38: #{tpu_custom_call.1} parent=35 // pred_check_branch
          %286 = sbr.rel (%p284) target = $region40
        $region39: #{tpu_custom_call.1} parent=35 // pred_region
          %s287 = sand.u32 %s93, 1
          %s288 = scalar_lea.sflag [#allocation3], %s287
          %s289 = sand.u32 %s93, 1
          %s290 = smul.addr %s289, 32
          %s291 = scalar_lea.vmem [#allocation2], %s290
          %293 = dma.done %s288, 512
        $region40: #{tpu_custom_call.1} parent=35 // pred_fallthru
          _
      $region36: #{tpu_custom_call.1} parent=5 // pred_fallthru
        _
    $region6: #{tpu_custom_call.1} parent=1 // loop_footer
      %s15 = sadd.s32 1, %s11
    $region7: #{tpu_custom_call.1} parent=1 // loop_footer_branch
      %10 = sbr.rel target = $region3
    $region8: #{tpu_custom_call.1} parent=1 // loop_exit
      _
    %294 = vsyncpa [#allocation3], 1
    %s295 = scalar_lea.sflag [#allocation3], 1
    %296 = vsyncpa %s295, 1

</llo_original>
